<compile_context>
chip_gen: v5e
topology: v5e:2x2
jax: 0.10.0
libtpu: 0.0.40
codegen_flags: <defaults>
</compile_context>

<pallas_src>
import functools

import jax
import jax.numpy as jnp
from jax.experimental import pallas as pl
from jax.experimental.pallas import tpu as pltpu


def _round_up(x, m):
    return ((x + m - 1) // m) * m


def _pick_divisor_tile(size, max_tile, unit):
    """Largest multiple of `unit` <= max_tile that divides `size`.

    `size` and `max_tile` must themselves be multiples of `unit`.
    """
    t = min(max_tile, size)
    while size % t:
        t -= unit
    return t


# ----------------------------------------------------------------------------
# Pallas kernel: tiled  out = [leaky_relu]( A[M,K] @ W[K,N] (+ b[1,N]) )
# ----------------------------------------------------------------------------
def _fused_matmul_kernel(*refs, has_bias, use_scratch, negative_slope,
                         apply_act):
    a_ref, w_ref = refs[0], refs[1]
    pos = 2
    b_ref = None
    if has_bias:
        b_ref = refs[pos]
        pos += 1
    o_ref = refs[pos]
    pos += 1
    # f32 outputs (the tiny-N heads) accumulate straight into o_ref: the out
    # block stays VMEM-resident across the K axis, so no scratch is needed.
    acc_ref = refs[pos] if use_scratch else o_ref

    k = pl.program_id(2)

    @pl.when(k == 0)
    def _():
        acc_ref[...] = jnp.zeros_like(acc_ref)

    # bf16 x bf16 -> f32 accumulate on the MXU.
    acc_ref[...] += jnp.dot(a_ref[...], w_ref[...],
                            preferred_element_type=jnp.float32)

    @pl.when(k == pl.num_programs(2) - 1)
    def _():
        acc = acc_ref[...]
        if has_bias:
            acc = acc + b_ref[...]                   # (1, tn) broadcasts
        if apply_act:
            acc = jnp.where(acc >= 0.0, acc, negative_slope * acc)
        o_ref[...] = acc.astype(o_ref.dtype)


def fused_matmul(a, w, b=None, *, apply_act, negative_slope=0.01,
                 out_dtype=jnp.bfloat16, tm_max=512, tk_max=1024, tn_max=512):
    """a: (M, Kp) bf16, Kp % 128 == 0; w: (Kp, N); b: (N,) or None -> (M, N)."""
    M, Kp = a.shape
    Kw, N = w.shape
    assert Kw == Kp and Kp % 128 == 0
    assert a.dtype == jnp.bfloat16

    # --- N: pad the (small) weight/bias to a lane-dense multiple of tn ------
    tn = min(tn_max, _round_up(N, 128))      # keeps tn >= 256 when Cout >= 256
    Np = _round_up(N, tn)

    # --- K: already zero-padded by the caller; tk must divide Kp ------------
    tk = _pick_divisor_tile(Kp, tk_max, 128)

    # --- M: never copy the (large) A operand; ragged last M tile is fine ----
    if M % 16 == 0:
        Mp = M
    else:                       # only the tiny conv2 head (M = batch) hits this
        Mp = _round_up(M, 16)
        a = jnp.pad(a, ((0, Mp - M), (0, 0)))
    tm = min(tm_max, Mp)

    # v7x megacore: keep >= 2 tiles in the parallel (i, j) space for layers
    # with non-trivial work so both TensorCores get used (no-op on v5e/v6e,
    # never triggers for tiny problems).
    if Mp * Np * Kp >= (1 << 22):
        while pl.cdiv(Mp, tm) * (Np // tn) < 2 and tm > 128:
            tm = max(128, _round_up(tm // 2, 16))

    w_p = w.astype(jnp.bfloat16)
    if Np != N:
        w_p = jnp.pad(w_p, ((0, 0), (0, Np - N)))

    has_bias = b is not None
    use_scratch = out_dtype != jnp.float32

    in_specs = [
        pl.BlockSpec((tm, tk), lambda i, j, k: (i, k)),
        pl.BlockSpec((tk, tn), lambda i, j, k: (k, j)),
    ]
    operands = [a, w_p]
    if has_bias:
        b_p = b.reshape(1, N).astype(jnp.float32)
        if Np != N:
            b_p = jnp.pad(b_p, ((0, 0), (0, Np - N)))
        # (0, j) is constant across k, so the bias block is fetched once per
        # output tile, not once per K step.
        in_specs.append(pl.BlockSpec((1, tn), lambda i, j, k: (0, j)))
        operands.append(b_p)

    scratch = [pltpu.VMEM((tm, tn), jnp.float32)] if use_scratch else []

    kernel = functools.partial(_fused_matmul_kernel,
                               has_bias=has_bias, use_scratch=use_scratch,
                               negative_slope=negative_slope,
                               apply_act=apply_act)

    out = pl.pallas_call(
        kernel,
        out_shape=jax.ShapeDtypeStruct((Mp, Np), out_dtype),
        grid=(pl.cdiv(Mp, tm), Np // tn, Kp // tk),
        in_specs=in_specs,
        out_specs=pl.BlockSpec((tm, tn), lambda i, j, k: (i, j)),
        scratch_shapes=scratch,
        compiler_params=pltpu.CompilerParams(
            dimension_semantics=("parallel", "parallel", "arbitrary"),
            vmem_limit_bytes=32 * 1024 * 1024),
    )(*operands)
    return out[:M, :N]


# ----------------------------------------------------------------------------
# Conv2d via NHWC im2col (single fused bf16/K-padded emission) + Pallas GEMM
# ----------------------------------------------------------------------------
def _im2col_nhwc(x, k, stride, pad, k_align=128):
    """x: (B,H,W,C) bf16 -> (B*Ho*Wo, Kp) patches with (kh, kw, C) ordering.

    The K-padding zero block is appended inside the single concatenate so the
    kh*kw-expanded patch tensor is materialized exactly once, already bf16 and
    already lane-aligned (Kp % k_align == 0).
    """
    B, H, W, C = x.shape
    xp = x if pad == 0 else jnp.pad(x, ((0, 0), (pad, pad), (pad, pad), (0, 0)))
    Hp, Wp = H + 2 * pad, W + 2 * pad
    Ho = (Hp - k) // stride + 1
    Wo = (Wp - k) // stride + 1
    K = k * k * C
    Kp = _round_up(K, k_align)
    cols = []
    for i in range(k):
        for j in range(k):
            cols.append(xp[:, i:i + stride * Ho:stride,
                           j:j + stride * Wo:stride, :])
    if Kp != K:
        cols.append(jnp.zeros((B, Ho, Wo, Kp - K), x.dtype))
    patches = jnp.concatenate(cols, axis=-1)            # (B, Ho, Wo, Kp)
    return patches.reshape(B * Ho * Wo, Kp), Ho, Wo


def conv2d_pallas(x_nhwc, w_oihw, b, *, stride, pad, apply_act,
                  out_dtype=jnp.bfloat16, tk_max=1024):
    """x: (B,H,W,Cin) NHWC; w: (Cout,Cin,kh,kw) OIHW -> (B,Ho,Wo,Cout) NHWC."""
    B, H, W, Cin = x_nhwc.shape
    Cout, Cin2, kh, kw = w_oihw.shape
    assert Cin == Cin2 and kh == kw
    a, Ho, Wo = _im2col_nhwc(x_nhwc.astype(jnp.bfloat16), kh, stride, pad)
    K = kh * kw * Cin
    Kp = a.shape[1]
    # (Cout,Cin,kh,kw) -> (kh,kw,Cin,Cout): matches im2col column order; the
    # zero K-pad rows line up with the zero columns appended by im2col.
    wm = jnp.transpose(w_oihw, (2, 3, 1, 0)).reshape(K, Cout)
    if Kp != K:
        wm = jnp.pad(wm, ((0, Kp - K), (0, 0)))
    out = fused_matmul(a, wm, b, apply_act=apply_act, out_dtype=out_dtype,
                       tk_max=tk_max)
    return out.reshape(B, Ho, Wo, Cout)


# ----------------------------------------------------------------------------
# Discriminator forward (NCHW at the module boundary, NHWC bf16 internally)
# ----------------------------------------------------------------------------
def discriminator_forward(x, params):
    h = jnp.transpose(x, (0, 2, 3, 1))                 # NCHW -> NHWC once
    for w, b in params["main"]:
        h = conv2d_pallas(h, w, b, stride=2, pad=1, apply_act=True,
                          out_dtype=jnp.bfloat16)      # LeakyReLU(0.01)
    # Tiny-N heads: f32 output, no scratch (direct accumulation), deep tk.
    out_src = conv2d_pallas(h, params["conv1_w"], None, stride=1, pad=1,
                            apply_act=False, out_dtype=jnp.float32,
                            tk_max=2048)
    out_cls = conv2d_pallas(h, params["conv2_w"], None, stride=1, pad=0,
                            apply_act=False, out_dtype=jnp.float32,
                            tk_max=2048)
    out_src = jnp.transpose(out_src, (0, 3, 1, 2))     # NHWC -> NCHW once
    out_cls = out_cls.reshape(out_cls.shape[0], out_cls.shape[3])  # (B, c_dim)
    return out_src, out_cls


def init_params(key, *, image_size, conv_dim, c_dim, repeat_num):
    layer_dims = [(3, conv_dim)]
    curr = conv_dim
    for _ in range(1, repeat_num):
        layer_dims.append((curr, curr * 2))
        curr *= 2
    final_k = image_size // (2 ** repeat_num)

    keys = jax.random.split(key, 2 * len(layer_dims) + 2)
    main = []
    for idx, (cin, cout) in enumerate(layer_dims):
        w = 0.05 * jax.random.normal(keys[2 * idx], (cout, cin, 4, 4),
                                     jnp.float32)
        b = 0.05 * jax.random.normal(keys[2 * idx + 1], (cout,), jnp.float32)
        main.append((w, b))
    conv1_w = 0.05 * jax.random.normal(keys[-2], (1, curr, 3, 3), jnp.float32)
    conv2_w = 0.05 * jax.random.normal(keys[-1], (c_dim, curr, final_k, final_k),
                                       jnp.float32)
    return {"main": main, "conv1_w": conv1_w, "conv2_w": conv2_w}


# ----------------------------------------------------------------------------
# Pure-JAX float32 reference (correctness sanity check)
# ----------------------------------------------------------------------------
def _ref_conv(x, w, b, stride, pad):
    out = jax.lax.conv_general_dilated(
        x, w, window_strides=(stride, stride),
        padding=[(pad, pad), (pad, pad)],
        dimension_numbers=("NCHW", "OIHW", "NCHW"),
    )
    if b is not None:
        out = out + b.reshape(1, -1, 1, 1)
    return out


def _ref_forward(x, params):
    h = x
    for w, b in params["main"]:
        h = _ref_conv(h, w, b, 2, 1)
        h = jnp.where(h >= 0.0, h, 0.01 * h)
    out_src = _ref_conv(h, params["conv1_w"], None, 1, 1)
    out_cls = _ref_conv(h, params["conv2_w"], None, 1, 0)
    return out_src, out_cls.reshape(out_cls.shape[0], out_cls.shape[1])


if __name__ == "__main__":
    # Small config consistent with the module: image_size=16, conv_dim=8,
    # c_dim=5, repeat_num=2  ->  16 -> 8 -> 4 spatial, final conv kernel = 4.
    image_size, conv_dim, c_dim, repeat_num, B = 16, 8, 5, 2, 2

    key = jax.random.PRNGKey(0)
    k_x, k_p = jax.random.split(key)
    x = jax.random.normal(k_x, (B, 3, image_size, image_size), jnp.float32)
    params = init_params(k_p, image_size=image_size, conv_dim=conv_dim,
                         c_dim=c_dim, repeat_num=repeat_num)

    fwd = jax.jit(discriminator_forward)
    out_src, out_cls = fwd(x, params)
    jax.block_until_ready((out_src, out_cls))

    final_hw = image_size // 2 ** repeat_num
    assert out_src.shape == (B, 1, final_hw, final_hw)
    assert out_cls.shape == (B, c_dim)

    ref_src, ref_cls = _ref_forward(x, params)
    # bf16 operands / intermediate activations with f32 accumulation: allow a
    # modest tolerance vs the pure-f32 reference.
    assert jnp.allclose(out_src, ref_src, atol=2e-2, rtol=2e-2)
    assert jnp.allclose(out_cls, ref_cls, atol=2e-2, rtol=2e-2)

    print("KERNEL_OK")
</pallas_src>

<mosaic_0001>
module attributes {stable_mosaic.version = 11 : i64} {
  func.func @_fused_matmul_kernel(%arg0: i32, %arg1: i32, %arg2: i32, %arg3: memref<128x128xbf16, #tpu.memory_space<vmem>>, %arg4: memref<128x128xbf16, #tpu.memory_space<vmem>>, %arg5: memref<1x128xf32, #tpu.memory_space<vmem>>, %arg6: memref<128x128xbf16, #tpu.memory_space<vmem>>, %arg7: memref<128x128xf32, #tpu.memory_space<vmem>>) attributes {dimension_semantics = [#tpu.dimension_semantics<parallel>, #tpu.dimension_semantics<parallel>, #tpu.dimension_semantics<arbitrary>], iteration_bounds = array<i64: 1, 1, 1>, scalar_prefetch = 0 : i64, scratch_operands = 1 : i64, tpu.core_type = #tpu.core_type<tc>, window_params = [{transform_indices = @transform_0, window_bounds = array<i64: 128, 128>}, {transform_indices = @transform_1, window_bounds = array<i64: 128, 128>}, {transform_indices = @transform_2, window_bounds = array<i64: 1, 128>}, {transform_indices = @transform_3, window_bounds = array<i64: 128, 128>}]} {
    %c0_i32 = arith.constant 0 : i32
    %0 = arith.cmpi eq, %arg2, %c0_i32 : i32
    %1 = arith.extui %0 : i1 to i32
    %c0_i32_0 = arith.constant 0 : i32
    %2 = arith.cmpi ne, %1, %c0_i32_0 : i32
    scf.if %2 {
      %cst_10 = arith.constant 0.000000e+00 : f32
      %12 = vector.broadcast %cst_10 : f32 to vector<128x128xf32>
      %c0_11 = arith.constant 0 : index
      %c0_12 = arith.constant 0 : index
      %13 = vector.load %arg7[%c0_11, %c0_12] : memref<128x128xf32, #tpu.memory_space<vmem>>, vector<128x128xf32>
      tpu.vector_store %arg7[%c0_11, %c0_12], %12 {strides = array<i32>} : memref<128x128xf32, #tpu.memory_space<vmem>>, vector<128x128xf32>,
    } else {
    }
    %c0 = arith.constant 0 : index
    %c0_1 = arith.constant 0 : index
    %3 = vector.load %arg7[%c0, %c0_1] : memref<128x128xf32, #tpu.memory_space<vmem>>, vector<128x128xf32>
    %c0_2 = arith.constant 0 : index
    %c0_3 = arith.constant 0 : index
    %4 = vector.load %arg3[%c0_2, %c0_3] : memref<128x128xbf16, #tpu.memory_space<vmem>>, vector<128x128xbf16>
    %c0_4 = arith.constant 0 : index
    %c0_5 = arith.constant 0 : index
    %5 = vector.load %arg4[%c0_4, %c0_5] : memref<128x128xbf16, #tpu.memory_space<vmem>>, vector<128x128xbf16>
    %cst = arith.constant dense<0.000000e+00> : vector<128x128xf32>
    %6 = tpu.matmul %4, %5, %cst {dimension_numbers = #tpu.dot_dimension_numbers<[1], [0], [0], [1], [0, 0, 1, 1], [], []>} : vector<128x128xbf16>, vector<128x128xbf16>, vector<128x128xf32> -> vector<128x128xf32>
    %7 = arith.addf %3, %6 : vector<128x128xf32>
    %c0_6 = arith.constant 0 : index
    %c0_7 = arith.constant 0 : index
    %8 = vector.load %arg7[%c0_6, %c0_7] : memref<128x128xf32, #tpu.memory_space<vmem>>, vector<128x128xf32>
    tpu.vector_store %arg7[%c0_6, %c0_7], %7 {strides = array<i32>} : memref<128x128xf32, #tpu.memory_space<vmem>>, vector<128x128xf32>,
    %c0_i32_8 = arith.constant 0 : i32
    %9 = arith.cmpi eq, %arg2, %c0_i32_8 : i32
    %10 = arith.extui %9 : i1 to i32
    %c0_i32_9 = arith.constant 0 : i32
    %11 = arith.cmpi ne, %10, %c0_i32_9 : i32
    scf.if %11 {
      %c0_10 = arith.constant 0 : index
      %c0_11 = arith.constant 0 : index
      %12 = vector.load %arg7[%c0_10, %c0_11] : memref<128x128xf32, #tpu.memory_space<vmem>>, vector<128x128xf32>
      %c0_12 = arith.constant 0 : index
      %c0_13 = arith.constant 0 : index
      %13 = vector.load %arg5[%c0_12, %c0_13] : memref<1x128xf32, #tpu.memory_space<vmem>>, vector<1x128xf32>
      %14 = vector.broadcast %13 : vector<1x128xf32> to vector<128x128xf32>
      %15 = arith.addf %12, %14 : vector<128x128xf32>
      %cst_14 = arith.constant 0.000000e+00 : f32
      %16 = vector.broadcast %cst_14 : f32 to vector<128x128xf32>
      %17 = arith.cmpf oge, %15, %16 : vector<128x128xf32>
      %cst_15 = arith.constant 0.00999999977 : f32
      %18 = vector.broadcast %cst_15 : f32 to vector<128x128xf32>
      %19 = arith.mulf %18, %15 : vector<128x128xf32>
      %20 = arith.select %17, %15, %19 : vector<128x128xi1>, vector<128x128xf32>
      %21 = arith.truncf %20 : vector<128x128xf32> to vector<128x128xbf16>
      %c0_16 = arith.constant 0 : index
      %c0_17 = arith.constant 0 : index
      %22 = vector.load %arg6[%c0_16, %c0_17] : memref<128x128xbf16, #tpu.memory_space<vmem>>, vector<128x128xbf16>
      tpu.vector_store %arg6[%c0_16, %c0_17], %21 {strides = array<i32>} : memref<128x128xbf16, #tpu.memory_space<vmem>>, vector<128x128xbf16>,
    } else {
    }
    return
  }
  func.func @transform_0(%arg0: i32, %arg1: i32, %arg2: i32) -> (i32, i32) {
    %c0_i32 = arith.constant 0 : i32
    return %arg0, %arg2 : i32, i32
  }
  func.func @transform_1(%arg0: i32, %arg1: i32, %arg2: i32) -> (i32, i32) {
    %c0_i32 = arith.constant 0 : i32
    return %arg2, %arg1 : i32, i32
  }
  func.func @transform_2(%arg0: i32, %arg1: i32, %arg2: i32) -> (i32, i32) {
    %c0_i32 = arith.constant 0 : i32
    %c0_i32_0 = arith.constant 0 : i32
    return %c0_i32, %arg1 : i32, i32
  }
  func.func @transform_3(%arg0: i32, %arg1: i32, %arg2: i32) -> (i32, i32) {
    %c0_i32 = arith.constant 0 : i32
    return %arg0, %arg1 : i32, i32
  }
}

module attributes {stable_mosaic.version = 11 : i64} {
  func.func @_fused_matmul_kernel(%arg0: i32, %arg1: i32, %arg2: i32, %arg3: memref<32x128xbf16, #tpu.memory_space<vmem>>, %arg4: memref<128x128xbf16, #tpu.memory_space<vmem>>, %arg5: memref<1x128xf32, #tpu.memory_space<vmem>>, %arg6: memref<32x128xbf16, #tpu.memory_space<vmem>>, %arg7: memref<32x128xf32, #tpu.memory_space<vmem>>) attributes {dimension_semantics = [#tpu.dimension_semantics<parallel>, #tpu.dimension_semantics<parallel>, #tpu.dimension_semantics<arbitrary>], iteration_bounds = array<i64: 1, 1, 1>, scalar_prefetch = 0 : i64, scratch_operands = 1 : i64, tpu.core_type = #tpu.core_type<tc>, window_params = [{transform_indices = @transform_0, window_bounds = array<i64: 32, 128>}, {transform_indices = @transform_1, window_bounds = array<i64: 128, 128>}, {transform_indices = @transform_2, window_bounds = array<i64: 1, 128>}, {transform_indices = @transform_3, window_bounds = array<i64: 32, 128>}]} {
    %c0_i32 = arith.constant 0 : i32
    %0 = arith.cmpi eq, %arg2, %c0_i32 : i32
    %1 = arith.extui %0 : i1 to i32
    %c0_i32_0 = arith.constant 0 : i32
    %2 = arith.cmpi ne, %1, %c0_i32_0 : i32
    scf.if %2 {
      %cst_10 = arith.constant 0.000000e+00 : f32
      %12 = vector.broadcast %cst_10 : f32 to vector<32x128xf32>
      %c0_11 = arith.constant 0 : index
      %c0_12 = arith.constant 0 : index
      %13 = vector.load %arg7[%c0_11, %c0_12] : memref<32x128xf32, #tpu.memory_space<vmem>>, vector<32x128xf32>
      tpu.vector_store %arg7[%c0_11, %c0_12], %12 {strides = array<i32>} : memref<32x128xf32, #tpu.memory_space<vmem>>, vector<32x128xf32>,
    } else {
    }
    %c0 = arith.constant 0 : index
    %c0_1 = arith.constant 0 : index
    %3 = vector.load %arg7[%c0, %c0_1] : memref<32x128xf32, #tpu.memory_space<vmem>>, vector<32x128xf32>
    %c0_2 = arith.constant 0 : index
    %c0_3 = arith.constant 0 : index
    %4 = vector.load %arg3[%c0_2, %c0_3] : memref<32x128xbf16, #tpu.memory_space<vmem>>, vector<32x128xbf16>
    %c0_4 = arith.constant 0 : index
    %c0_5 = arith.constant 0 : index
    %5 = vector.load %arg4[%c0_4, %c0_5] : memref<128x128xbf16, #tpu.memory_space<vmem>>, vector<128x128xbf16>
    %cst = arith.constant dense<0.000000e+00> : vector<32x128xf32>
    %6 = tpu.matmul %4, %5, %cst {dimension_numbers = #tpu.dot_dimension_numbers<[1], [0], [0], [1], [0, 0, 1, 1], [], []>} : vector<32x128xbf16>, vector<128x128xbf16>, vector<32x128xf32> -> vector<32x128xf32>
    %7 = arith.addf %3, %6 : vector<32x128xf32>
    %c0_6 = arith.constant 0 : index
    %c0_7 = arith.constant 0 : index
    %8 = vector.load %arg7[%c0_6, %c0_7] : memref<32x128xf32, #tpu.memory_space<vmem>>, vector<32x128xf32>
    tpu.vector_store %arg7[%c0_6, %c0_7], %7 {strides = array<i32>} : memref<32x128xf32, #tpu.memory_space<vmem>>, vector<32x128xf32>,
    %c0_i32_8 = arith.constant 0 : i32
    %9 = arith.cmpi eq, %arg2, %c0_i32_8 : i32
    %10 = arith.extui %9 : i1 to i32
    %c0_i32_9 = arith.constant 0 : i32
    %11 = arith.cmpi ne, %10, %c0_i32_9 : i32
    scf.if %11 {
      %c0_10 = arith.constant 0 : index
      %c0_11 = arith.constant 0 : index
      %12 = vector.load %arg7[%c0_10, %c0_11] : memref<32x128xf32, #tpu.memory_space<vmem>>, vector<32x128xf32>
      %c0_12 = arith.constant 0 : index
      %c0_13 = arith.constant 0 : index
      %13 = vector.load %arg5[%c0_12, %c0_13] : memref<1x128xf32, #tpu.memory_space<vmem>>, vector<1x128xf32>
      %14 = vector.broadcast %13 : vector<1x128xf32> to vector<32x128xf32>
      %15 = arith.addf %12, %14 : vector<32x128xf32>
      %cst_14 = arith.constant 0.000000e+00 : f32
      %16 = vector.broadcast %cst_14 : f32 to vector<32x128xf32>
      %17 = arith.cmpf oge, %15, %16 : vector<32x128xf32>
      %cst_15 = arith.constant 0.00999999977 : f32
      %18 = vector.broadcast %cst_15 : f32 to vector<32x128xf32>
      %19 = arith.mulf %18, %15 : vector<32x128xf32>
      %20 = arith.select %17, %15, %19 : vector<32x128xi1>, vector<32x128xf32>
      %21 = arith.truncf %20 : vector<32x128xf32> to vector<32x128xbf16>
      %c0_16 = arith.constant 0 : index
      %c0_17 = arith.constant 0 : index
      %22 = vector.load %arg6[%c0_16, %c0_17] : memref<32x128xbf16, #tpu.memory_space<vmem>>, vector<32x128xbf16>
      tpu.vector_store %arg6[%c0_16, %c0_17], %21 {strides = array<i32>} : memref<32x128xbf16, #tpu.memory_space<vmem>>, vector<32x128xbf16>,
    } else {
    }
    return
  }
  func.func @transform_0(%arg0: i32, %arg1: i32, %arg2: i32) -> (i32, i32) {
    %c0_i32 = arith.constant 0 : i32
    return %arg0, %arg2 : i32, i32
  }
  func.func @transform_1(%arg0: i32, %arg1: i32, %arg2: i32) -> (i32, i32) {
    %c0_i32 = arith.constant 0 : i32
    return %arg2, %arg1 : i32, i32
  }
  func.func @transform_2(%arg0: i32, %arg1: i32, %arg2: i32) -> (i32, i32) {
    %c0_i32 = arith.constant 0 : i32
    %c0_i32_0 = arith.constant 0 : i32
    return %c0_i32, %arg1 : i32, i32
  }
  func.func @transform_3(%arg0: i32, %arg1: i32, %arg2: i32) -> (i32, i32) {
    %c0_i32 = arith.constant 0 : i32
    return %arg0, %arg1 : i32, i32
  }
}

module attributes {stable_mosaic.version = 11 : i64} {
  func.func @_fused_matmul_kernel(%arg0: i32, %arg1: i32, %arg2: i32, %arg3: memref<16x256xbf16, #tpu.memory_space<vmem>>, %arg4: memref<256x128xbf16, #tpu.memory_space<vmem>>, %arg5: memref<16x128xf32, #tpu.memory_space<vmem>>) attributes {dimension_semantics = [#tpu.dimension_semantics<parallel>, #tpu.dimension_semantics<parallel>, #tpu.dimension_semantics<arbitrary>], iteration_bounds = array<i64: 1, 1, 1>, scalar_prefetch = 0 : i64, scratch_operands = 0 : i64, tpu.core_type = #tpu.core_type<tc>, window_params = [{transform_indices = @transform_0, window_bounds = array<i64: 16, 256>}, {transform_indices = @transform_1, window_bounds = array<i64: 256, 128>}, {transform_indices = @transform_2, window_bounds = array<i64: 16, 128>}]} {
    %c0_i32 = arith.constant 0 : i32
    %0 = arith.cmpi eq, %arg2, %c0_i32 : i32
    %1 = arith.extui %0 : i1 to i32
    %c0_i32_0 = arith.constant 0 : i32
    %2 = arith.cmpi ne, %1, %c0_i32_0 : i32
    scf.if %2 {
      %cst_10 = arith.constant 0.000000e+00 : f32
      %12 = vector.broadcast %cst_10 : f32 to vector<16x128xf32>
      %c0_11 = arith.constant 0 : index
      %c0_12 = arith.constant 0 : index
      %13 = vector.load %arg5[%c0_11, %c0_12] : memref<16x128xf32, #tpu.memory_space<vmem>>, vector<16x128xf32>
      tpu.vector_store %arg5[%c0_11, %c0_12], %12 {strides = array<i32>} : memref<16x128xf32, #tpu.memory_space<vmem>>, vector<16x128xf32>,
    } else {
    }
    %c0 = arith.constant 0 : index
    %c0_1 = arith.constant 0 : index
    %3 = vector.load %arg5[%c0, %c0_1] : memref<16x128xf32, #tpu.memory_space<vmem>>, vector<16x128xf32>
    %c0_2 = arith.constant 0 : index
    %c0_3 = arith.constant 0 : index
    %4 = vector.load %arg3[%c0_2, %c0_3] : memref<16x256xbf16, #tpu.memory_space<vmem>>, vector<16x256xbf16>
    %c0_4 = arith.constant 0 : index
    %c0_5 = arith.constant 0 : index
    %5 = vector.load %arg4[%c0_4, %c0_5] : memref<256x128xbf16, #tpu.memory_space<vmem>>, vector<256x128xbf16>
    %cst = arith.constant dense<0.000000e+00> : vector<16x128xf32>
    %6 = tpu.matmul %4, %5, %cst {dimension_numbers = #tpu.dot_dimension_numbers<[1], [0], [0], [1], [0, 0, 1, 1], [], []>} : vector<16x256xbf16>, vector<256x128xbf16>, vector<16x128xf32> -> vector<16x128xf32>
    %7 = arith.addf %3, %6 : vector<16x128xf32>
    %c0_6 = arith.constant 0 : index
    %c0_7 = arith.constant 0 : index
    %8 = vector.load %arg5[%c0_6, %c0_7] : memref<16x128xf32, #tpu.memory_space<vmem>>, vector<16x128xf32>
    tpu.vector_store %arg5[%c0_6, %c0_7], %7 {strides = array<i32>} : memref<16x128xf32, #tpu.memory_space<vmem>>, vector<16x128xf32>,
    %c0_i32_8 = arith.constant 0 : i32
    %9 = arith.cmpi eq, %arg2, %c0_i32_8 : i32
    %10 = arith.extui %9 : i1 to i32
    %c0_i32_9 = arith.constant 0 : i32
    %11 = arith.cmpi ne, %10, %c0_i32_9 : i32
    scf.if %11 {
      %c0_10 = arith.constant 0 : index
      %c0_11 = arith.constant 0 : index
      %12 = vector.load %arg5[%c0_10, %c0_11] : memref<16x128xf32, #tpu.memory_space<vmem>>, vector<16x128xf32>
      %c0_12 = arith.constant 0 : index
      %c0_13 = arith.constant 0 : index
      %13 = vector.load %arg5[%c0_12, %c0_13] : memref<16x128xf32, #tpu.memory_space<vmem>>, vector<16x128xf32>
      tpu.vector_store %arg5[%c0_12, %c0_13], %12 {strides = array<i32>} : memref<16x128xf32, #tpu.memory_space<vmem>>, vector<16x128xf32>,
    } else {
    }
    return
  }
  func.func @transform_0(%arg0: i32, %arg1: i32, %arg2: i32) -> (i32, i32) {
    %c0_i32 = arith.constant 0 : i32
    return %arg0, %arg2 : i32, i32
  }
  func.func @transform_1(%arg0: i32, %arg1: i32, %arg2: i32) -> (i32, i32) {
    %c0_i32 = arith.constant 0 : i32
    return %arg2, %arg1 : i32, i32
  }
  func.func @transform_2(%arg0: i32, %arg1: i32, %arg2: i32) -> (i32, i32) {
    %c0_i32 = arith.constant 0 : i32
    return %arg0, %arg1 : i32, i32
  }
}

module attributes {stable_mosaic.version = 11 : i64} {
  func.func @_fused_matmul_kernel(%arg0: i32, %arg1: i32, %arg2: i32, %arg3: memref<32x256xbf16, #tpu.memory_space<vmem>>, %arg4: memref<256x128xbf16, #tpu.memory_space<vmem>>, %arg5: memref<32x128xf32, #tpu.memory_space<vmem>>) attributes {dimension_semantics = [#tpu.dimension_semantics<parallel>, #tpu.dimension_semantics<parallel>, #tpu.dimension_semantics<arbitrary>], iteration_bounds = array<i64: 1, 1, 1>, scalar_prefetch = 0 : i64, scratch_operands = 0 : i64, tpu.core_type = #tpu.core_type<tc>, window_params = [{transform_indices = @transform_0, window_bounds = array<i64: 32, 256>}, {transform_indices = @transform_1, window_bounds = array<i64: 256, 128>}, {transform_indices = @transform_2, window_bounds = array<i64: 32, 128>}]} {
    %c0_i32 = arith.constant 0 : i32
    %0 = arith.cmpi eq, %arg2, %c0_i32 : i32
    %1 = arith.extui %0 : i1 to i32
    %c0_i32_0 = arith.constant 0 : i32
    %2 = arith.cmpi ne, %1, %c0_i32_0 : i32
    scf.if %2 {
      %cst_10 = arith.constant 0.000000e+00 : f32
      %12 = vector.broadcast %cst_10 : f32 to vector<32x128xf32>
      %c0_11 = arith.constant 0 : index
      %c0_12 = arith.constant 0 : index
      %13 = vector.load %arg5[%c0_11, %c0_12] : memref<32x128xf32, #tpu.memory_space<vmem>>, vector<32x128xf32>
      tpu.vector_store %arg5[%c0_11, %c0_12], %12 {strides = array<i32>} : memref<32x128xf32, #tpu.memory_space<vmem>>, vector<32x128xf32>,
    } else {
    }
    %c0 = arith.constant 0 : index
    %c0_1 = arith.constant 0 : index
    %3 = vector.load %arg5[%c0, %c0_1] : memref<32x128xf32, #tpu.memory_space<vmem>>, vector<32x128xf32>
    %c0_2 = arith.constant 0 : index
    %c0_3 = arith.constant 0 : index
    %4 = vector.load %arg3[%c0_2, %c0_3] : memref<32x256xbf16, #tpu.memory_space<vmem>>, vector<32x256xbf16>
    %c0_4 = arith.constant 0 : index
    %c0_5 = arith.constant 0 : index
    %5 = vector.load %arg4[%c0_4, %c0_5] : memref<256x128xbf16, #tpu.memory_space<vmem>>, vector<256x128xbf16>
    %cst = arith.constant dense<0.000000e+00> : vector<32x128xf32>
    %6 = tpu.matmul %4, %5, %cst {dimension_numbers = #tpu.dot_dimension_numbers<[1], [0], [0], [1], [0, 0, 1, 1], [], []>} : vector<32x256xbf16>, vector<256x128xbf16>, vector<32x128xf32> -> vector<32x128xf32>
    %7 = arith.addf %3, %6 : vector<32x128xf32>
    %c0_6 = arith.constant 0 : index
    %c0_7 = arith.constant 0 : index
    %8 = vector.load %arg5[%c0_6, %c0_7] : memref<32x128xf32, #tpu.memory_space<vmem>>, vector<32x128xf32>
    tpu.vector_store %arg5[%c0_6, %c0_7], %7 {strides = array<i32>} : memref<32x128xf32, #tpu.memory_space<vmem>>, vector<32x128xf32>,
    %c0_i32_8 = arith.constant 0 : i32
    %9 = arith.cmpi eq, %arg2, %c0_i32_8 : i32
    %10 = arith.extui %9 : i1 to i32
    %c0_i32_9 = arith.constant 0 : i32
    %11 = arith.cmpi ne, %10, %c0_i32_9 : i32
    scf.if %11 {
      %c0_10 = arith.constant 0 : index
      %c0_11 = arith.constant 0 : index
      %12 = vector.load %arg5[%c0_10, %c0_11] : memref<32x128xf32, #tpu.memory_space<vmem>>, vector<32x128xf32>
      %c0_12 = arith.constant 0 : index
      %c0_13 = arith.constant 0 : index
      %13 = vector.load %arg5[%c0_12, %c0_13] : memref<32x128xf32, #tpu.memory_space<vmem>>, vector<32x128xf32>
      tpu.vector_store %arg5[%c0_12, %c0_13], %12 {strides = array<i32>} : memref<32x128xf32, #tpu.memory_space<vmem>>, vector<32x128xf32>,
    } else {
    }
    return
  }
  func.func @transform_0(%arg0: i32, %arg1: i32, %arg2: i32) -> (i32, i32) {
    %c0_i32 = arith.constant 0 : i32
    return %arg0, %arg2 : i32, i32
  }
  func.func @transform_1(%arg0: i32, %arg1: i32, %arg2: i32) -> (i32, i32) {
    %c0_i32 = arith.constant 0 : i32
    return %arg2, %arg1 : i32, i32
  }
  func.func @transform_2(%arg0: i32, %arg1: i32, %arg2: i32) -> (i32, i32) {
    %c0_i32 = arith.constant 0 : i32
    return %arg0, %arg1 : i32, i32
  }
}

</mosaic_0001>

<llo_original>
// kernel: discriminator_forward.4
$region0: #{discriminator_forward.4}
  #allocation0 [shape = 'u32[]', space=smem, size = 0x4, offset = 0x4, fixed_abs, tag = 'smem constant byte address 0x4 - core index']
  #allocation1 [shape = 'u32[72,128]{1,0:T(1,128)}', space=vmem, size = 0x9000, scoped, tag = 'internal scratch']
  #allocation2 [shape = 'f32[128,128]{1,0:T(8,128)}', space=vmem, size = 0x10000, scoped, tag = 'scratch operand']
  %s0 = inlined_call_operand.vmem [shape: bf16[128,128], index: 0, kind: input, shape index: {}]
  %s1 = inlined_call_operand.vmem [shape: bf16[128,128], index: 1, kind: input, shape index: {}]
  %s2 = inlined_call_operand.vmem [shape: f32[1,128], index: 2, kind: input, shape index: {}]
  %s3 = inlined_call_operand.vmem [shape: bf16[128,128], index: 3, kind: output, shape index: {}]
  %s4 = sld [smem:[#allocation0]]
  $region30: #{discriminator_forward.4} parent=0
    _
  %s6 = ssub.s32 1, %s4
  %s7 = scalar_select 0, %s6, %s4
  // Predicated region
  $region2: #{discriminator_forward.4} parent=0 // pred_check
    _
  $region3: #{discriminator_forward.4} parent=0 // pred_check_branch
    %9 = sbr.rel (0) target = $region5
  $region4: #{discriminator_forward.4} parent=0 // pred_region
    _
  $region5: #{discriminator_forward.4} parent=0 // pred_fallthru
    _
  // Predicated region
  $region6: #{discriminator_forward.4} parent=0 // pred_check
    _
  $region7: #{discriminator_forward.4} parent=0 // pred_check_branch
    %11 = sbr.rel (0) target = $region9
  $region8: #{discriminator_forward.4} parent=0 // pred_region
    _
  $region9: #{discriminator_forward.4} parent=0 // pred_fallthru
    _
  // Predicated region
  $region10: #{discriminator_forward.4} parent=0 // pred_check
    _
  $region11: #{discriminator_forward.4} parent=0 // pred_check_branch
    %13 = sbr.rel (0) target = $region13
  $region12: #{discriminator_forward.4} parent=0 // pred_region
    _
  $region13: #{discriminator_forward.4} parent=0 // pred_fallthru
    _
  %p14 = scmp.eq.s32.totalorder 0, 0
  // Predicated region
  $region14: #{discriminator_forward.4} parent=0 // pred_check
    %p15 = pneg %p14
  $region15: #{discriminator_forward.4} parent=0 // pred_check_branch
    %17 = sbr.rel (%p15) target = $region17
  $region16: #{discriminator_forward.4} parent=0 // pred_region
    %18 = vst [vmem:[#allocation2] sm:$0xff] 0.0
    %19 = vst [vmem:[#allocation2 + $0x8] sm:$0xff] 0.0
    %20 = vst [vmem:[#allocation2 + $0x10] sm:$0xff] 0.0
    %21 = vst [vmem:[#allocation2 + $0x18] sm:$0xff] 0.0
    %22 = vst [vmem:[#allocation2 + $0x20] sm:$0xff] 0.0
    %23 = vst [vmem:[#allocation2 + $0x28] sm:$0xff] 0.0
    %24 = vst [vmem:[#allocation2 + $0x30] sm:$0xff] 0.0
    %25 = vst [vmem:[#allocation2 + $0x38] sm:$0xff] 0.0
    %26 = vst [vmem:[#allocation2 + $0x40] sm:$0xff] 0.0
    %27 = vst [vmem:[#allocation2 + $0x48] sm:$0xff] 0.0
    %28 = vst [vmem:[#allocation2 + $0x50] sm:$0xff] 0.0
    %29 = vst [vmem:[#allocation2 + $0x58] sm:$0xff] 0.0
    %30 = vst [vmem:[#allocation2 + $0x60] sm:$0xff] 0.0
    %31 = vst [vmem:[#allocation2 + $0x68] sm:$0xff] 0.0
    %32 = vst [vmem:[#allocation2 + $0x70] sm:$0xff] 0.0
    %33 = vst [vmem:[#allocation2 + $0x78] sm:$0xff] 0.0
  $region17: #{discriminator_forward.4} parent=0 // pred_fallthru
    _
  %v34 = vld [vmem:[#allocation2] sm:$0xff]
  %v35 = vld [vmem:[#allocation2 + $0x8] sm:$0xff]
  %v36 = vld [vmem:[#allocation2 + $0x10] sm:$0xff]
  %v37 = vld [vmem:[#allocation2 + $0x18] sm:$0xff]
  %v38 = vld [vmem:[#allocation2 + $0x20] sm:$0xff]
  %v39 = vld [vmem:[#allocation2 + $0x28] sm:$0xff]
  %v40 = vld [vmem:[#allocation2 + $0x30] sm:$0xff]
  %v41 = vld [vmem:[#allocation2 + $0x38] sm:$0xff]
  %v42 = vld [vmem:[#allocation2 + $0x40] sm:$0xff]
  %v43 = vld [vmem:[#allocation2 + $0x48] sm:$0xff]
  %v44 = vld [vmem:[#allocation2 + $0x50] sm:$0xff]
  %v45 = vld [vmem:[#allocation2 + $0x58] sm:$0xff]
  %v46 = vld [vmem:[#allocation2 + $0x60] sm:$0xff]
  %v47 = vld [vmem:[#allocation2 + $0x68] sm:$0xff]
  %v48 = vld [vmem:[#allocation2 + $0x70] sm:$0xff]
  %v49 = vld [vmem:[#allocation2 + $0x78] sm:$0xff]
  %v50 = vld [vmem:[%s0] sm:$0xf]
  %v51 = vld [vmem:[%s0 + $0x4] sm:$0xf]
  %v52 = vld [vmem:[%s0 + $0x8] sm:$0xf]
  %v53 = vld [vmem:[%s0 + $0xc] sm:$0xf]
  %v54 = vld [vmem:[%s0 + $0x10] sm:$0xf]
  %v55 = vld [vmem:[%s0 + $0x14] sm:$0xf]
  %v56 = vld [vmem:[%s0 + $0x18] sm:$0xf]
  %v57 = vld [vmem:[%s0 + $0x1c] sm:$0xf]
  %v58 = vld [vmem:[%s0 + $0x20] sm:$0xf]
  %v59 = vld [vmem:[%s0 + $0x24] sm:$0xf]
  %v60 = vld [vmem:[%s0 + $0x28] sm:$0xf]
  %v61 = vld [vmem:[%s0 + $0x2c] sm:$0xf]
  %v62 = vld [vmem:[%s0 + $0x30] sm:$0xf]
  %v63 = vld [vmem:[%s0 + $0x34] sm:$0xf]
  %v64 = vld [vmem:[%s0 + $0x38] sm:$0xf]
  %v65 = vld [vmem:[%s0 + $0x3c] sm:$0xf]
  %v66 = vld [vmem:[%s1] sm:$0xf]
  %v67 = vld [vmem:[%s1 + $0x4] sm:$0xf]
  %v68 = vld [vmem:[%s1 + $0x8] sm:$0xf]
  %v69 = vld [vmem:[%s1 + $0xc] sm:$0xf]
  %v70 = vld [vmem:[%s1 + $0x10] sm:$0xf]
  %v71 = vld [vmem:[%s1 + $0x14] sm:$0xf]
  %v72 = vld [vmem:[%s1 + $0x18] sm:$0xf]
  %v73 = vld [vmem:[%s1 + $0x1c] sm:$0xf]
  %v74 = vld [vmem:[%s1 + $0x20] sm:$0xf]
  %v75 = vld [vmem:[%s1 + $0x24] sm:$0xf]
  %v76 = vld [vmem:[%s1 + $0x28] sm:$0xf]
  %v77 = vld [vmem:[%s1 + $0x2c] sm:$0xf]
  %v78 = vld [vmem:[%s1 + $0x30] sm:$0xf]
  %v79 = vld [vmem:[%s1 + $0x34] sm:$0xf]
  %v80 = vld [vmem:[%s1 + $0x38] sm:$0xf]
  %v81 = vld [vmem:[%s1 + $0x3c] sm:$0xf]
  %v98 = vunpack.c.l.b16 %v50
  %v99 = vunpack.c.l.b16 %v51
  %v100 = vunpack.c.l.b16 %v52
  %v101 = vunpack.c.l.b16 %v53
  %v102 = vunpack.c.l.b16 %v54
  %v103 = vunpack.c.l.b16 %v55
  %v104 = vunpack.c.l.b16 %v56
  %v105 = vunpack.c.l.b16 %v57
  %v106 = vunpack.c.l.b16 %v58
  %v107 = vunpack.c.l.b16 %v59
  %v108 = vunpack.c.l.b16 %v60
  %v109 = vunpack.c.l.b16 %v61
  %v110 = vunpack.c.l.b16 %v62
  %v111 = vunpack.c.l.b16 %v63
  %v112 = vunpack.c.l.b16 %v64
  %v113 = vunpack.c.l.b16 %v65
  %v114 = vpack.c.b16 %v99, %v98
  %v115 = vpack.c.b16 %v101, %v100
  %v116 = vpack.c.b16 %v103, %v102
  %v117 = vpack.c.b16 %v105, %v104
  %v118 = vpack.c.b16 %v107, %v106
  %v119 = vpack.c.b16 %v109, %v108
  %v120 = vpack.c.b16 %v111, %v110
  %v121 = vpack.c.b16 %v113, %v112
  %v146 = vunpack.c.l.b16 %v66
  %v147 = vunpack.c.l.b16 %v67
  %v148 = vunpack.c.l.b16 %v68
  %v149 = vunpack.c.l.b16 %v69
  %v150 = vunpack.c.l.b16 %v70
  %v151 = vunpack.c.l.b16 %v71
  %v152 = vunpack.c.l.b16 %v72
  %v153 = vunpack.c.l.b16 %v73
  %v154 = vunpack.c.l.b16 %v74
  %v155 = vunpack.c.l.b16 %v75
  %v156 = vunpack.c.l.b16 %v76
  %v157 = vunpack.c.l.b16 %v77
  %v158 = vunpack.c.l.b16 %v78
  %v159 = vunpack.c.l.b16 %v79
  %v160 = vunpack.c.l.b16 %v80
  %v161 = vunpack.c.l.b16 %v81
  %v162 = vpack.c.b16 %v147, %v146
  %v163 = vpack.c.b16 %v149, %v148
  %v164 = vpack.c.b16 %v151, %v150
  %v165 = vpack.c.b16 %v153, %v152
  %v166 = vpack.c.b16 %v155, %v154
  %v167 = vpack.c.b16 %v157, %v156
  %v168 = vpack.c.b16 %v159, %v158
  %v169 = vpack.c.b16 %v161, %v160
  %178 = vmatpush.bf16.msra.mxu0 %v169
  %179 = vmatpush.bf16.msra.mxu0 %v168
  %180 = vmatpush.bf16.msra.mxu0 %v167
  %181 = vmatpush.bf16.msra.mxu0 %v166
  %182 = vmatpush.bf16.msra.mxu0 %v165
  %183 = vmatpush.bf16.msra.mxu0 %v164
  %184 = vmatpush.bf16.msra.mxu0 %v163
  %185 = vmatpush.bf16.msra.mxu0 %v162
  %186 = vmatmul.bf16.gmra.mxu0 %v114
  %v187 = vpop.f32.mrf.mxu0
  %v188 = vadd.f32 0.0, %v187
  %v189 = vpop.f32.mrf.mxu0
  %v190 = vadd.f32 0.0, %v189
  %191 = vmatmul.bf16.gmra.mxu0 %v115
  %v192 = vpop.f32.mrf.mxu0
  %v193 = vadd.f32 0.0, %v192
  %v194 = vpop.f32.mrf.mxu0
  %v195 = vadd.f32 0.0, %v194
  %196 = vmatmul.bf16.gmra.mxu0 %v116
  %v197 = vpop.f32.mrf.mxu0
  %v198 = vadd.f32 0.0, %v197
  %v199 = vpop.f32.mrf.mxu0
  %v200 = vadd.f32 0.0, %v199
  %201 = vmatmul.bf16.gmra.mxu0 %v117
  %v202 = vpop.f32.mrf.mxu0
  %v203 = vadd.f32 0.0, %v202
  %v204 = vpop.f32.mrf.mxu0
  %v205 = vadd.f32 0.0, %v204
  %206 = vmatmul.bf16.gmra.mxu0 %v118
  %v207 = vpop.f32.mrf.mxu0
  %v208 = vadd.f32 0.0, %v207
  %v209 = vpop.f32.mrf.mxu0
  %v210 = vadd.f32 0.0, %v209
  %211 = vmatmul.bf16.gmra.mxu0 %v119
  %v212 = vpop.f32.mrf.mxu0
  %v213 = vadd.f32 0.0, %v212
  %v214 = vpop.f32.mrf.mxu0
  %v215 = vadd.f32 0.0, %v214
  %216 = vmatmul.bf16.gmra.mxu0 %v120
  %v217 = vpop.f32.mrf.mxu0
  %v218 = vadd.f32 0.0, %v217
  %v219 = vpop.f32.mrf.mxu0
  %v220 = vadd.f32 0.0, %v219
  %221 = vmatmul.bf16.gmra.mxu0 %v121
  %v222 = vpop.f32.mrf.mxu0
  %v223 = vadd.f32 0.0, %v222
  %v224 = vpop.f32.mrf.mxu0
  %v225 = vadd.f32 0.0, %v224
  %226 = vdwg.mxu0
  %v227 = vadd.f32 %v34, %v188
  %v228 = vadd.f32 %v35, %v190
  %v229 = vadd.f32 %v36, %v193
  %v230 = vadd.f32 %v37, %v195
  %v231 = vadd.f32 %v38, %v198
  %v232 = vadd.f32 %v39, %v200
  %v233 = vadd.f32 %v40, %v203
  %v234 = vadd.f32 %v41, %v205
  %v235 = vadd.f32 %v42, %v208
  %v236 = vadd.f32 %v43, %v210
  %v237 = vadd.f32 %v44, %v213
  %v238 = vadd.f32 %v45, %v215
  %v239 = vadd.f32 %v46, %v218
  %v240 = vadd.f32 %v47, %v220
  %v241 = vadd.f32 %v48, %v223
  %v242 = vadd.f32 %v49, %v225
  %243 = vst [vmem:[#allocation2] sm:$0xff] %v227
  %244 = vst [vmem:[#allocation2 + $0x8] sm:$0xff] %v228
  %245 = vst [vmem:[#allocation2 + $0x10] sm:$0xff] %v229
  %246 = vst [vmem:[#allocation2 + $0x18] sm:$0xff] %v230
  %247 = vst [vmem:[#allocation2 + $0x20] sm:$0xff] %v231
  %248 = vst [vmem:[#allocation2 + $0x28] sm:$0xff] %v232
  %249 = vst [vmem:[#allocation2 + $0x30] sm:$0xff] %v233
  %250 = vst [vmem:[#allocation2 + $0x38] sm:$0xff] %v234
  %251 = vst [vmem:[#allocation2 + $0x40] sm:$0xff] %v235
  %252 = vst [vmem:[#allocation2 + $0x48] sm:$0xff] %v236
  %253 = vst [vmem:[#allocation2 + $0x50] sm:$0xff] %v237
  %254 = vst [vmem:[#allocation2 + $0x58] sm:$0xff] %v238
  %255 = vst [vmem:[#allocation2 + $0x60] sm:$0xff] %v239
  %256 = vst [vmem:[#allocation2 + $0x68] sm:$0xff] %v240
  %257 = vst [vmem:[#allocation2 + $0x70] sm:$0xff] %v241
  %258 = vst [vmem:[#allocation2 + $0x78] sm:$0xff] %v242
  // Predicated region
  $region18: #{discriminator_forward.4} parent=0 // pred_check
    %p259 = pneg %p14
  $region19: #{discriminator_forward.4} parent=0 // pred_check_branch
    %261 = sbr.rel (%p259) target = $region21
  $region20: #{discriminator_forward.4} parent=0 // pred_region
    %v262 = vld [vmem:[#allocation2] sm:$0xff]
    %v263 = vld [vmem:[#allocation2 + $0x8] sm:$0xff]
    %v264 = vld [vmem:[#allocation2 + $0x10] sm:$0xff]
    %v265 = vld [vmem:[#allocation2 + $0x18] sm:$0xff]
    %v266 = vld [vmem:[#allocation2 + $0x20] sm:$0xff]
    %v267 = vld [vmem:[#allocation2 + $0x28] sm:$0xff]
    %v268 = vld [vmem:[#allocation2 + $0x30] sm:$0xff]
    %v269 = vld [vmem:[#allocation2 + $0x38] sm:$0xff]
    %v270 = vld [vmem:[#allocation2 + $0x40] sm:$0xff]
    %v271 = vld [vmem:[#allocation2 + $0x48] sm:$0xff]
    %v272 = vld [vmem:[#allocation2 + $0x50] sm:$0xff]
    %v273 = vld [vmem:[#allocation2 + $0x58] sm:$0xff]
    %v274 = vld [vmem:[#allocation2 + $0x60] sm:$0xff]
    %v275 = vld [vmem:[#allocation2 + $0x68] sm:$0xff]
    %v276 = vld [vmem:[#allocation2 + $0x70] sm:$0xff]
    %v277 = vld [vmem:[#allocation2 + $0x78] sm:$0xff]
    %v278 = vld [vmem:[%s2] sm:$0x1]
    %v280 = vperm.slane %v278, 0
    %v282 = vadd.f32 %v262, %v280
    %v283 = vadd.f32 %v263, %v280
    %v284 = vadd.f32 %v264, %v280
    %v285 = vadd.f32 %v265, %v280
    %v286 = vadd.f32 %v266, %v280
    %v287 = vadd.f32 %v267, %v280
    %v288 = vadd.f32 %v268, %v280
    %v289 = vadd.f32 %v269, %v280
    %v290 = vadd.f32 %v270, %v280
    %v291 = vadd.f32 %v271, %v280
    %v292 = vadd.f32 %v272, %v280
    %v293 = vadd.f32 %v273, %v280
    %v294 = vadd.f32 %v274, %v280
    %v295 = vadd.f32 %v275, %v280
    %v296 = vadd.f32 %v276, %v280
    %v297 = vadd.f32 %v277, %v280
    %vm298 = vcmp.ge.f32.partialorder %v282, 0.0
    %vm299 = vcmp.ge.f32.partialorder %v283, 0.0
    %vm300 = vcmp.ge.f32.partialorder %v284, 0.0
    %vm301 = vcmp.ge.f32.partialorder %v285, 0.0
    %vm302 = vcmp.ge.f32.partialorder %v286, 0.0
    %vm303 = vcmp.ge.f32.partialorder %v287, 0.0
    %vm304 = vcmp.ge.f32.partialorder %v288, 0.0
    %vm305 = vcmp.ge.f32.partialorder %v289, 0.0
    %vm306 = vcmp.ge.f32.partialorder %v290, 0.0
    %vm307 = vcmp.ge.f32.partialorder %v291, 0.0
    %vm308 = vcmp.ge.f32.partialorder %v292, 0.0
    %vm309 = vcmp.ge.f32.partialorder %v293, 0.0
    %vm310 = vcmp.ge.f32.partialorder %v294, 0.0
    %vm311 = vcmp.ge.f32.partialorder %v295, 0.0
    %vm312 = vcmp.ge.f32.partialorder %v296, 0.0
    %vm313 = vcmp.ge.f32.partialorder %v297, 0.0
    %v314 = vmul.f32 %v282, 0.01
    %v315 = vmul.f32 %v283, 0.01
    %v316 = vmul.f32 %v284, 0.01
    %v317 = vmul.f32 %v285, 0.01
    %v318 = vmul.f32 %v286, 0.01
    %v319 = vmul.f32 %v287, 0.01
    %v320 = vmul.f32 %v288, 0.01
    %v321 = vmul.f32 %v289, 0.01
    %v322 = vmul.f32 %v290, 0.01
    %v323 = vmul.f32 %v291, 0.01
    %v324 = vmul.f32 %v292, 0.01
    %v325 = vmul.f32 %v293, 0.01
    %v326 = vmul.f32 %v294, 0.01
    %v327 = vmul.f32 %v295, 0.01
    %v328 = vmul.f32 %v296, 0.01
    %v329 = vmul.f32 %v297, 0.01
    %v330 = vsel %vm298, %v282, %v314
    %v331 = vsel %vm299, %v283, %v315
    %v332 = vsel %vm300, %v284, %v316
    %v333 = vsel %vm301, %v285, %v317
    %v334 = vsel %vm302, %v286, %v318
    %v335 = vsel %vm303, %v287, %v319
    %v336 = vsel %vm304, %v288, %v320
    %v337 = vsel %vm305, %v289, %v321
    %v338 = vsel %vm306, %v290, %v322
    %v339 = vsel %vm307, %v291, %v323
    %v340 = vsel %vm308, %v292, %v324
    %v341 = vsel %vm309, %v293, %v325
    %v342 = vsel %vm310, %v294, %v326
    %v343 = vsel %vm311, %v295, %v327
    %v344 = vsel %vm312, %v296, %v328
    %v345 = vsel %vm313, %v297, %v329
    %v346 = vpack.c.bf16 %v330, %v330
    %v347 = vpack.c.bf16 %v331, %v331
    %v348 = vpack.c.bf16 %v332, %v332
    %v349 = vpack.c.bf16 %v333, %v333
    %v350 = vpack.c.bf16 %v334, %v334
    %v351 = vpack.c.bf16 %v335, %v335
    %v352 = vpack.c.bf16 %v336, %v336
    %v353 = vpack.c.bf16 %v337, %v337
    %v354 = vpack.c.bf16 %v338, %v338
    %v355 = vpack.c.bf16 %v339, %v339
    %v356 = vpack.c.bf16 %v340, %v340
    %v357 = vpack.c.bf16 %v341, %v341
    %v358 = vpack.c.bf16 %v342, %v342
    %v359 = vpack.c.bf16 %v343, %v343
    %v360 = vpack.c.bf16 %v344, %v344
    %v361 = vpack.c.bf16 %v345, %v345
    %362 = vst [vmem:[%s3] sm:$0xf] %v346
    %363 = vst [vmem:[%s3 + $0x4] sm:$0xf] %v347
    %364 = vst [vmem:[%s3 + $0x8] sm:$0xf] %v348
    %365 = vst [vmem:[%s3 + $0xc] sm:$0xf] %v349
    %366 = vst [vmem:[%s3 + $0x10] sm:$0xf] %v350
    %367 = vst [vmem:[%s3 + $0x14] sm:$0xf] %v351
    %368 = vst [vmem:[%s3 + $0x18] sm:$0xf] %v352
    %369 = vst [vmem:[%s3 + $0x1c] sm:$0xf] %v353
    %370 = vst [vmem:[%s3 + $0x20] sm:$0xf] %v354
    %371 = vst [vmem:[%s3 + $0x24] sm:$0xf] %v355
    %372 = vst [vmem:[%s3 + $0x28] sm:$0xf] %v356
    %373 = vst [vmem:[%s3 + $0x2c] sm:$0xf] %v357
    %374 = vst [vmem:[%s3 + $0x30] sm:$0xf] %v358
    %375 = vst [vmem:[%s3 + $0x34] sm:$0xf] %v359
    %376 = vst [vmem:[%s3 + $0x38] sm:$0xf] %v360
    %377 = vst [vmem:[%s3 + $0x3c] sm:$0xf] %v361
  $region21: #{discriminator_forward.4} parent=0 // pred_fallthru
    _
  // Predicated region
  $region22: #{discriminator_forward.4} parent=0 // pred_check
    _
  $region23: #{discriminator_forward.4} parent=0 // pred_check_branch
    %379 = sbr.rel (0) target = $region25
  $region24: #{discriminator_forward.4} parent=0 // pred_region
    _
  $region25: #{discriminator_forward.4} parent=0 // pred_fallthru
    _
  // Predicated region
  $region26: #{discriminator_forward.4} parent=0 // pred_check
    _
  $region27: #{discriminator_forward.4} parent=0 // pred_check_branch
    %381 = sbr.rel (0) target = $region29
  $region28: #{discriminator_forward.4} parent=0 // pred_region
    _
  $region29: #{discriminator_forward.4} parent=0 // pred_fallthru
    _

// kernel: discriminator_forward.5
$region0: #{discriminator_forward.5}
  #allocation0 [shape = 'u32[]', space=smem, size = 0x4, offset = 0x4, fixed_abs, tag = 'smem constant byte address 0x4 - core index']
  #allocation1 [shape = 'u32[72,128]{1,0:T(1,128)}', space=vmem, size = 0x9000, scoped, tag = 'internal scratch']
  #allocation2 [shape = 'f32[32,128]{1,0:T(8,128)}', space=vmem, size = 0x4000, scoped, tag = 'scratch operand']
  %s0 = inlined_call_operand.vmem [shape: bf16[32,128], index: 0, kind: input, shape index: {}]
  %s1 = inlined_call_operand.vmem [shape: bf16[128,128], index: 1, kind: input, shape index: {}]
  %s2 = inlined_call_operand.vmem [shape: f32[1,128], index: 2, kind: input, shape index: {}]
  %s3 = inlined_call_operand.vmem [shape: bf16[32,128], index: 3, kind: output, shape index: {}]
  %s4 = sld [smem:[#allocation0]]
  $region30: #{discriminator_forward.5} parent=0
    _
  %s6 = ssub.s32 1, %s4
  %s7 = scalar_select 0, %s6, %s4
  // Predicated region
  $region2: #{discriminator_forward.5} parent=0 // pred_check
    _
  $region3: #{discriminator_forward.5} parent=0 // pred_check_branch
    %9 = sbr.rel (0) target = $region5
  $region4: #{discriminator_forward.5} parent=0 // pred_region
    _
  $region5: #{discriminator_forward.5} parent=0 // pred_fallthru
    _
  // Predicated region
  $region6: #{discriminator_forward.5} parent=0 // pred_check
    _
  $region7: #{discriminator_forward.5} parent=0 // pred_check_branch
    %11 = sbr.rel (0) target = $region9
  $region8: #{discriminator_forward.5} parent=0 // pred_region
    _
  $region9: #{discriminator_forward.5} parent=0 // pred_fallthru
    _
  // Predicated region
  $region10: #{discriminator_forward.5} parent=0 // pred_check
    _
  $region11: #{discriminator_forward.5} parent=0 // pred_check_branch
    %13 = sbr.rel (0) target = $region13
  $region12: #{discriminator_forward.5} parent=0 // pred_region
    _
  $region13: #{discriminator_forward.5} parent=0 // pred_fallthru
    _
  %p14 = scmp.eq.s32.totalorder 0, 0
  // Predicated region
  $region14: #{discriminator_forward.5} parent=0 // pred_check
    %p15 = pneg %p14
  $region15: #{discriminator_forward.5} parent=0 // pred_check_branch
    %17 = sbr.rel (%p15) target = $region17
  $region16: #{discriminator_forward.5} parent=0 // pred_region
    %18 = vst [vmem:[#allocation2] sm:$0xff] 0.0
    %19 = vst [vmem:[#allocation2 + $0x8] sm:$0xff] 0.0
    %20 = vst [vmem:[#allocation2 + $0x10] sm:$0xff] 0.0
    %21 = vst [vmem:[#allocation2 + $0x18] sm:$0xff] 0.0
  $region17: #{discriminator_forward.5} parent=0 // pred_fallthru
    _
  %v22 = vld [vmem:[#allocation2] sm:$0xff]
  %v23 = vld [vmem:[#allocation2 + $0x8] sm:$0xff]
  %v24 = vld [vmem:[#allocation2 + $0x10] sm:$0xff]
  %v25 = vld [vmem:[#allocation2 + $0x18] sm:$0xff]
  %v26 = vld [vmem:[%s0] sm:$0xf]
  %v27 = vld [vmem:[%s0 + $0x4] sm:$0xf]
  %v28 = vld [vmem:[%s0 + $0x8] sm:$0xf]
  %v29 = vld [vmem:[%s0 + $0xc] sm:$0xf]
  %v30 = vld [vmem:[%s1] sm:$0xf]
  %v31 = vld [vmem:[%s1 + $0x4] sm:$0xf]
  %v32 = vld [vmem:[%s1 + $0x8] sm:$0xf]
  %v33 = vld [vmem:[%s1 + $0xc] sm:$0xf]
  %v34 = vld [vmem:[%s1 + $0x10] sm:$0xf]
  %v35 = vld [vmem:[%s1 + $0x14] sm:$0xf]
  %v36 = vld [vmem:[%s1 + $0x18] sm:$0xf]
  %v37 = vld [vmem:[%s1 + $0x1c] sm:$0xf]
  %v38 = vld [vmem:[%s1 + $0x20] sm:$0xf]
  %v39 = vld [vmem:[%s1 + $0x24] sm:$0xf]
  %v40 = vld [vmem:[%s1 + $0x28] sm:$0xf]
  %v41 = vld [vmem:[%s1 + $0x2c] sm:$0xf]
  %v42 = vld [vmem:[%s1 + $0x30] sm:$0xf]
  %v43 = vld [vmem:[%s1 + $0x34] sm:$0xf]
  %v44 = vld [vmem:[%s1 + $0x38] sm:$0xf]
  %v45 = vld [vmem:[%s1 + $0x3c] sm:$0xf]
  %v50 = vunpack.c.l.b16 %v26
  %v51 = vunpack.c.l.b16 %v27
  %v52 = vunpack.c.l.b16 %v28
  %v53 = vunpack.c.l.b16 %v29
  %v54 = vpack.c.b16 %v51, %v50
  %v55 = vpack.c.b16 %v53, %v52
  %v74 = vunpack.c.l.b16 %v30
  %v75 = vunpack.c.l.b16 %v31
  %v76 = vunpack.c.l.b16 %v32
  %v77 = vunpack.c.l.b16 %v33
  %v78 = vunpack.c.l.b16 %v34
  %v79 = vunpack.c.l.b16 %v35
  %v80 = vunpack.c.l.b16 %v36
  %v81 = vunpack.c.l.b16 %v37
  %v82 = vunpack.c.l.b16 %v38
  %v83 = vunpack.c.l.b16 %v39
  %v84 = vunpack.c.l.b16 %v40
  %v85 = vunpack.c.l.b16 %v41
  %v86 = vunpack.c.l.b16 %v42
  %v87 = vunpack.c.l.b16 %v43
  %v88 = vunpack.c.l.b16 %v44
  %v89 = vunpack.c.l.b16 %v45
  %v90 = vpack.c.b16 %v75, %v74
  %v91 = vpack.c.b16 %v77, %v76
  %v92 = vpack.c.b16 %v79, %v78
  %v93 = vpack.c.b16 %v81, %v80
  %v94 = vpack.c.b16 %v83, %v82
  %v95 = vpack.c.b16 %v85, %v84
  %v96 = vpack.c.b16 %v87, %v86
  %v97 = vpack.c.b16 %v89, %v88
  %106 = vmatpush.bf16.msra.mxu0 %v97
  %107 = vmatpush.bf16.msra.mxu0 %v96
  %108 = vmatpush.bf16.msra.mxu0 %v95
  %109 = vmatpush.bf16.msra.mxu0 %v94
  %110 = vmatpush.bf16.msra.mxu0 %v93
  %111 = vmatpush.bf16.msra.mxu0 %v92
  %112 = vmatpush.bf16.msra.mxu0 %v91
  %113 = vmatpush.bf16.msra.mxu0 %v90
  %114 = vmatmul.bf16.gmra.mxu0 %v54
  %v115 = vpop.f32.mrf.mxu0
  %v116 = vadd.f32 0.0, %v115
  %v117 = vpop.f32.mrf.mxu0
  %v118 = vadd.f32 0.0, %v117
  %119 = vmatmul.bf16.gmra.mxu0 %v55
  %v120 = vpop.f32.mrf.mxu0
  %v121 = vadd.f32 0.0, %v120
  %v122 = vpop.f32.mrf.mxu0
  %v123 = vadd.f32 0.0, %v122
  %124 = vdwg.mxu0
  %v125 = vadd.f32 %v22, %v116
  %v126 = vadd.f32 %v23, %v118
  %v127 = vadd.f32 %v24, %v121
  %v128 = vadd.f32 %v25, %v123
  %129 = vst [vmem:[#allocation2] sm:$0xff] %v125
  %130 = vst [vmem:[#allocation2 + $0x8] sm:$0xff] %v126
  %131 = vst [vmem:[#allocation2 + $0x10] sm:$0xff] %v127
  %132 = vst [vmem:[#allocation2 + $0x18] sm:$0xff] %v128
  // Predicated region
  $region18: #{discriminator_forward.5} parent=0 // pred_check
    %p133 = pneg %p14
  $region19: #{discriminator_forward.5} parent=0 // pred_check_branch
    %135 = sbr.rel (%p133) target = $region21
  $region20: #{discriminator_forward.5} parent=0 // pred_region
    %v136 = vld [vmem:[#allocation2] sm:$0xff]
    %v137 = vld [vmem:[#allocation2 + $0x8] sm:$0xff]
    %v138 = vld [vmem:[#allocation2 + $0x10] sm:$0xff]
    %v139 = vld [vmem:[#allocation2 + $0x18] sm:$0xff]
    %v140 = vld [vmem:[%s2] sm:$0x1]
    %v142 = vperm.slane %v140, 0
    %v144 = vadd.f32 %v136, %v142
    %v145 = vadd.f32 %v137, %v142
    %v146 = vadd.f32 %v138, %v142
    %v147 = vadd.f32 %v139, %v142
    %vm148 = vcmp.ge.f32.partialorder %v144, 0.0
    %vm149 = vcmp.ge.f32.partialorder %v145, 0.0
    %vm150 = vcmp.ge.f32.partialorder %v146, 0.0
    %vm151 = vcmp.ge.f32.partialorder %v147, 0.0
    %v152 = vmul.f32 %v144, 0.01
    %v153 = vmul.f32 %v145, 0.01
    %v154 = vmul.f32 %v146, 0.01
    %v155 = vmul.f32 %v147, 0.01
    %v156 = vsel %vm148, %v144, %v152
    %v157 = vsel %vm149, %v145, %v153
    %v158 = vsel %vm150, %v146, %v154
    %v159 = vsel %vm151, %v147, %v155
    %v160 = vpack.c.bf16 %v156, %v156
    %v161 = vpack.c.bf16 %v157, %v157
    %v162 = vpack.c.bf16 %v158, %v158
    %v163 = vpack.c.bf16 %v159, %v159
    %164 = vst [vmem:[%s3] sm:$0xf] %v160
    %165 = vst [vmem:[%s3 + $0x4] sm:$0xf] %v161
    %166 = vst [vmem:[%s3 + $0x8] sm:$0xf] %v162
    %167 = vst [vmem:[%s3 + $0xc] sm:$0xf] %v163
  $region21: #{discriminator_forward.5} parent=0 // pred_fallthru
    _
  // Predicated region
  $region22: #{discriminator_forward.5} parent=0 // pred_check
    _
  $region23: #{discriminator_forward.5} parent=0 // pred_check_branch
    %169 = sbr.rel (0) target = $region25
  $region24: #{discriminator_forward.5} parent=0 // pred_region
    _
  $region25: #{discriminator_forward.5} parent=0 // pred_fallthru
    _
  // Predicated region
  $region26: #{discriminator_forward.5} parent=0 // pred_check
    _
  $region27: #{discriminator_forward.5} parent=0 // pred_check_branch
    %171 = sbr.rel (0) target = $region29
  $region28: #{discriminator_forward.5} parent=0 // pred_region
    _
  $region29: #{discriminator_forward.5} parent=0 // pred_fallthru
    _

// kernel: discriminator_forward.7
$region0: #{discriminator_forward.7}
  #allocation0 [shape = 'u32[]', space=smem, size = 0x4, offset = 0x4, fixed_abs, tag = 'smem constant byte address 0x4 - core index']
  #allocation1 [shape = 'u32[72,128]{1,0:T(1,128)}', space=vmem, size = 0x9000, scoped, tag = 'internal scratch']
  %s0 = inlined_call_operand.vmem [shape: bf16[16,256], index: 0, kind: input, shape index: {}]
  %s1 = inlined_call_operand.vmem [shape: bf16[256,128], index: 1, kind: input, shape index: {}]
  %s2 = inlined_call_operand.vmem [shape: f32[16,128], index: 2, kind: output, shape index: {}]
  %s3 = sld [smem:[#allocation0]]
  $region26: #{discriminator_forward.7} parent=0
    _
  %s5 = ssub.s32 1, %s3
  %s6 = scalar_select 0, %s5, %s3
  // Predicated region
  $region2: #{discriminator_forward.7} parent=0 // pred_check
    _
  $region3: #{discriminator_forward.7} parent=0 // pred_check_branch
    %8 = sbr.rel (0) target = $region5
  $region4: #{discriminator_forward.7} parent=0 // pred_region
    _
  $region5: #{discriminator_forward.7} parent=0 // pred_fallthru
    _
  // Predicated region
  $region6: #{discriminator_forward.7} parent=0 // pred_check
    _
  $region7: #{discriminator_forward.7} parent=0 // pred_check_branch
    %10 = sbr.rel (0) target = $region9
  $region8: #{discriminator_forward.7} parent=0 // pred_region
    _
  $region9: #{discriminator_forward.7} parent=0 // pred_fallthru
    _
  %p11 = scmp.eq.s32.totalorder 0, 0
  // Predicated region
  $region10: #{discriminator_forward.7} parent=0 // pred_check
    %p12 = pneg %p11
  $region11: #{discriminator_forward.7} parent=0 // pred_check_branch
    %14 = sbr.rel (%p12) target = $region13
  $region12: #{discriminator_forward.7} parent=0 // pred_region
    %15 = vst [vmem:[%s2] sm:$0xff] 0.0
    %16 = vst [vmem:[%s2 + $0x8] sm:$0xff] 0.0
  $region13: #{discriminator_forward.7} parent=0 // pred_fallthru
    _
  %v17 = vld [vmem:[%s2] sm:$0xff]
  %v18 = vld [vmem:[%s2 + $0x8] sm:$0xff]
  %v19 = vld [vmem:[%s0] sm:$0xff]
  %v20 = vld [vmem:[%s0 + $0x8] sm:$0xff]
  %v21 = vld [vmem:[%s1] sm:$0xf]
  %v22 = vld [vmem:[%s1 + $0x4] sm:$0xf]
  %v23 = vld [vmem:[%s1 + $0x8] sm:$0xf]
  %v24 = vld [vmem:[%s1 + $0xc] sm:$0xf]
  %v25 = vld [vmem:[%s1 + $0x10] sm:$0xf]
  %v26 = vld [vmem:[%s1 + $0x14] sm:$0xf]
  %v27 = vld [vmem:[%s1 + $0x18] sm:$0xf]
  %v28 = vld [vmem:[%s1 + $0x1c] sm:$0xf]
  %v29 = vld [vmem:[%s1 + $0x20] sm:$0xf]
  %v30 = vld [vmem:[%s1 + $0x24] sm:$0xf]
  %v31 = vld [vmem:[%s1 + $0x28] sm:$0xf]
  %v32 = vld [vmem:[%s1 + $0x2c] sm:$0xf]
  %v33 = vld [vmem:[%s1 + $0x30] sm:$0xf]
  %v34 = vld [vmem:[%s1 + $0x34] sm:$0xf]
  %v35 = vld [vmem:[%s1 + $0x38] sm:$0xf]
  %v36 = vld [vmem:[%s1 + $0x3c] sm:$0xf]
  %v37 = vld [vmem:[%s1 + $0x40] sm:$0xf]
  %v38 = vld [vmem:[%s1 + $0x44] sm:$0xf]
  %v39 = vld [vmem:[%s1 + $0x48] sm:$0xf]
  %v40 = vld [vmem:[%s1 + $0x4c] sm:$0xf]
  %v41 = vld [vmem:[%s1 + $0x50] sm:$0xf]
  %v42 = vld [vmem:[%s1 + $0x54] sm:$0xf]
  %v43 = vld [vmem:[%s1 + $0x58] sm:$0xf]
  %v44 = vld [vmem:[%s1 + $0x5c] sm:$0xf]
  %v45 = vld [vmem:[%s1 + $0x60] sm:$0xf]
  %v46 = vld [vmem:[%s1 + $0x64] sm:$0xf]
  %v47 = vld [vmem:[%s1 + $0x68] sm:$0xf]
  %v48 = vld [vmem:[%s1 + $0x6c] sm:$0xf]
  %v49 = vld [vmem:[%s1 + $0x70] sm:$0xf]
  %v50 = vld [vmem:[%s1 + $0x74] sm:$0xf]
  %v51 = vld [vmem:[%s1 + $0x78] sm:$0xf]
  %v52 = vld [vmem:[%s1 + $0x7c] sm:$0xf]
  %v55 = vunpack.c.l.b16 %v19
  %v56 = vunpack.c.h.b16 %v19
  %v57 = vunpack.c.l.b16 %v20
  %v58 = vunpack.c.h.b16 %v20
  %v59 = vpack.c.b16 %v57, %v55
  %v60 = vpack.c.b16 %v58, %v56
  %v95 = vunpack.c.l.b16 %v21
  %v96 = vunpack.c.l.b16 %v22
  %v97 = vunpack.c.l.b16 %v23
  %v98 = vunpack.c.l.b16 %v24
  %v99 = vunpack.c.l.b16 %v25
  %v100 = vunpack.c.l.b16 %v26
  %v101 = vunpack.c.l.b16 %v27
  %v102 = vunpack.c.l.b16 %v28
  %v103 = vunpack.c.l.b16 %v29
  %v104 = vunpack.c.l.b16 %v30
  %v105 = vunpack.c.l.b16 %v31
  %v106 = vunpack.c.l.b16 %v32
  %v107 = vunpack.c.l.b16 %v33
  %v108 = vunpack.c.l.b16 %v34
  %v109 = vunpack.c.l.b16 %v35
  %v110 = vunpack.c.l.b16 %v36
  %v111 = vunpack.c.l.b16 %v37
  %v112 = vunpack.c.l.b16 %v38
  %v113 = vunpack.c.l.b16 %v39
  %v114 = vunpack.c.l.b16 %v40
  %v115 = vunpack.c.l.b16 %v41
  %v116 = vunpack.c.l.b16 %v42
  %v117 = vunpack.c.l.b16 %v43
  %v118 = vunpack.c.l.b16 %v44
  %v119 = vunpack.c.l.b16 %v45
  %v120 = vunpack.c.l.b16 %v46
  %v121 = vunpack.c.l.b16 %v47
  %v122 = vunpack.c.l.b16 %v48
  %v123 = vunpack.c.l.b16 %v49
  %v124 = vunpack.c.l.b16 %v50
  %v125 = vunpack.c.l.b16 %v51
  %v126 = vunpack.c.l.b16 %v52
  %v127 = vpack.c.b16 %v96, %v95
  %v128 = vpack.c.b16 %v98, %v97
  %v129 = vpack.c.b16 %v100, %v99
  %v130 = vpack.c.b16 %v102, %v101
  %v131 = vpack.c.b16 %v104, %v103
  %v132 = vpack.c.b16 %v106, %v105
  %v133 = vpack.c.b16 %v108, %v107
  %v134 = vpack.c.b16 %v110, %v109
  %v135 = vpack.c.b16 %v112, %v111
  %v136 = vpack.c.b16 %v114, %v113
  %v137 = vpack.c.b16 %v116, %v115
  %v138 = vpack.c.b16 %v118, %v117
  %v139 = vpack.c.b16 %v120, %v119
  %v140 = vpack.c.b16 %v122, %v121
  %v141 = vpack.c.b16 %v124, %v123
  %v142 = vpack.c.b16 %v126, %v125
  %159 = vmatpush.bf16.msra.mxu0 %v134
  %160 = vmatpush.bf16.msra.mxu0 %v133
  %161 = vmatpush.bf16.msra.mxu0 %v132
  %162 = vmatpush.bf16.msra.mxu0 %v131
  %163 = vmatpush.bf16.msra.mxu0 %v130
  %164 = vmatpush.bf16.msra.mxu0 %v129
  %165 = vmatpush.bf16.msra.mxu0 %v128
  %166 = vmatpush.bf16.msra.mxu0 %v127
  %167 = vmatmul.bf16.gmra.mxu0 %v59
  %v168 = vpop.f32.mrf.mxu0
  %v169 = vadd.f32 0.0, %v168
  %v170 = vpop.f32.mrf.mxu0
  %v171 = vadd.f32 0.0, %v170
  %172 = vdwg.mxu0
  %173 = vmatpush.bf16.msra.mxu0 %v142
  %174 = vmatpush.bf16.msra.mxu0 %v141
  %175 = vmatpush.bf16.msra.mxu0 %v140
  %176 = vmatpush.bf16.msra.mxu0 %v139
  %177 = vmatpush.bf16.msra.mxu0 %v138
  %178 = vmatpush.bf16.msra.mxu0 %v137
  %179 = vmatpush.bf16.msra.mxu0 %v136
  %180 = vmatpush.bf16.msra.mxu0 %v135
  %181 = vmatmul.bf16.gmra.mxu0 %v60
  %v182 = vpop.f32.mrf.mxu0
  %v183 = vadd.f32 %v169, %v182
  %v184 = vpop.f32.mrf.mxu0
  %v185 = vadd.f32 %v171, %v184
  %186 = vdwg.mxu0
  %v187 = vadd.f32 %v17, %v183
  %v188 = vadd.f32 %v18, %v185
  %189 = vst [vmem:[%s2] sm:$0xff] %v187
  %190 = vst [vmem:[%s2 + $0x8] sm:$0xff] %v188
  // Predicated region
  $region14: #{discriminator_forward.7} parent=0 // pred_check
    %p191 = pneg %p11
  $region15: #{discriminator_forward.7} parent=0 // pred_check_branch
    %193 = sbr.rel (%p191) target = $region17
  $region16: #{discriminator_forward.7} parent=0 // pred_region
    %v194 = vld [vmem:[%s2] sm:$0xff]
    %v195 = vld [vmem:[%s2 + $0x8] sm:$0xff]
    %196 = vst [vmem:[%s2] sm:$0xff] %v194
    %197 = vst [vmem:[%s2 + $0x8] sm:$0xff] %v195
  $region17: #{discriminator_forward.7} parent=0 // pred_fallthru
    _
  // Predicated region
  $region18: #{discriminator_forward.7} parent=0 // pred_check
    _
  $region19: #{discriminator_forward.7} parent=0 // pred_check_branch
    %199 = sbr.rel (0) target = $region21
  $region20: #{discriminator_forward.7} parent=0 // pred_region
    _
  $region21: #{discriminator_forward.7} parent=0 // pred_fallthru
    _
  // Predicated region
  $region22: #{discriminator_forward.7} parent=0 // pred_check
    _
  $region23: #{discriminator_forward.7} parent=0 // pred_check_branch
    %201 = sbr.rel (0) target = $region25
  $region24: #{discriminator_forward.7} parent=0 // pred_region
    _
  $region25: #{discriminator_forward.7} parent=0 // pred_fallthru
    _

// kernel: discriminator_forward.6
$region0: #{discriminator_forward.6}
  #allocation0 [shape = 'u32[]', space=smem, size = 0x4, offset = 0x4, fixed_abs, tag = 'smem constant byte address 0x4 - core index']
  #allocation1 [shape = 'u32[72,128]{1,0:T(1,128)}', space=vmem, size = 0x9000, scoped, tag = 'internal scratch']
  %s0 = inlined_call_operand.vmem [shape: bf16[32,256], index: 0, kind: input, shape index: {}]
  %s1 = inlined_call_operand.vmem [shape: bf16[256,128], index: 1, kind: input, shape index: {}]
  %s2 = inlined_call_operand.vmem [shape: f32[32,128], index: 2, kind: output, shape index: {}]
  %s3 = sld [smem:[#allocation0]]
  $region26: #{discriminator_forward.6} parent=0
    _
  %s5 = ssub.s32 1, %s3
  %s6 = scalar_select 0, %s5, %s3
  // Predicated region
  $region2: #{discriminator_forward.6} parent=0 // pred_check
    _
  $region3: #{discriminator_forward.6} parent=0 // pred_check_branch
    %8 = sbr.rel (0) target = $region5
  $region4: #{discriminator_forward.6} parent=0 // pred_region
    _
  $region5: #{discriminator_forward.6} parent=0 // pred_fallthru
    _
  // Predicated region
  $region6: #{discriminator_forward.6} parent=0 // pred_check
    _
  $region7: #{discriminator_forward.6} parent=0 // pred_check_branch
    %10 = sbr.rel (0) target = $region9
  $region8: #{discriminator_forward.6} parent=0 // pred_region
    _
  $region9: #{discriminator_forward.6} parent=0 // pred_fallthru
    _
  %p11 = scmp.eq.s32.totalorder 0, 0
  // Predicated region
  $region10: #{discriminator_forward.6} parent=0 // pred_check
    %p12 = pneg %p11
  $region11: #{discriminator_forward.6} parent=0 // pred_check_branch
    %14 = sbr.rel (%p12) target = $region13
  $region12: #{discriminator_forward.6} parent=0 // pred_region
    %15 = vst [vmem:[%s2] sm:$0xff] 0.0
    %16 = vst [vmem:[%s2 + $0x8] sm:$0xff] 0.0
    %17 = vst [vmem:[%s2 + $0x10] sm:$0xff] 0.0
    %18 = vst [vmem:[%s2 + $0x18] sm:$0xff] 0.0
  $region13: #{discriminator_forward.6} parent=0 // pred_fallthru
    _
  %v19 = vld [vmem:[%s2] sm:$0xff]
  %v20 = vld [vmem:[%s2 + $0x8] sm:$0xff]
  %v21 = vld [vmem:[%s2 + $0x10] sm:$0xff]
  %v22 = vld [vmem:[%s2 + $0x18] sm:$0xff]
  %v23 = vld [vmem:[%s0] sm:$0xff]
  %v24 = vld [vmem:[%s0 + $0x8] sm:$0xff]
  %v25 = vld [vmem:[%s0 + $0x10] sm:$0xff]
  %v26 = vld [vmem:[%s0 + $0x18] sm:$0xff]
  %v27 = vld [vmem:[%s1] sm:$0xf]
  %v28 = vld [vmem:[%s1 + $0x4] sm:$0xf]
  %v29 = vld [vmem:[%s1 + $0x8] sm:$0xf]
  %v30 = vld [vmem:[%s1 + $0xc] sm:$0xf]
  %v31 = vld [vmem:[%s1 + $0x10] sm:$0xf]
  %v32 = vld [vmem:[%s1 + $0x14] sm:$0xf]
  %v33 = vld [vmem:[%s1 + $0x18] sm:$0xf]
  %v34 = vld [vmem:[%s1 + $0x1c] sm:$0xf]
  %v35 = vld [vmem:[%s1 + $0x20] sm:$0xf]
  %v36 = vld [vmem:[%s1 + $0x24] sm:$0xf]
  %v37 = vld [vmem:[%s1 + $0x28] sm:$0xf]
  %v38 = vld [vmem:[%s1 + $0x2c] sm:$0xf]
  %v39 = vld [vmem:[%s1 + $0x30] sm:$0xf]
  %v40 = vld [vmem:[%s1 + $0x34] sm:$0xf]
  %v41 = vld [vmem:[%s1 + $0x38] sm:$0xf]
  %v42 = vld [vmem:[%s1 + $0x3c] sm:$0xf]
  %v43 = vld [vmem:[%s1 + $0x40] sm:$0xf]
  %v44 = vld [vmem:[%s1 + $0x44] sm:$0xf]
  %v45 = vld [vmem:[%s1 + $0x48] sm:$0xf]
  %v46 = vld [vmem:[%s1 + $0x4c] sm:$0xf]
  %v47 = vld [vmem:[%s1 + $0x50] sm:$0xf]
  %v48 = vld [vmem:[%s1 + $0x54] sm:$0xf]
  %v49 = vld [vmem:[%s1 + $0x58] sm:$0xf]
  %v50 = vld [vmem:[%s1 + $0x5c] sm:$0xf]
  %v51 = vld [vmem:[%s1 + $0x60] sm:$0xf]
  %v52 = vld [vmem:[%s1 + $0x64] sm:$0xf]
  %v53 = vld [vmem:[%s1 + $0x68] sm:$0xf]
  %v54 = vld [vmem:[%s1 + $0x6c] sm:$0xf]
  %v55 = vld [vmem:[%s1 + $0x70] sm:$0xf]
  %v56 = vld [vmem:[%s1 + $0x74] sm:$0xf]
  %v57 = vld [vmem:[%s1 + $0x78] sm:$0xf]
  %v58 = vld [vmem:[%s1 + $0x7c] sm:$0xf]
  %v63 = vunpack.c.l.b16 %v23
  %v64 = vunpack.c.h.b16 %v23
  %v65 = vunpack.c.l.b16 %v24
  %v66 = vunpack.c.h.b16 %v24
  %v67 = vunpack.c.l.b16 %v25
  %v68 = vunpack.c.h.b16 %v25
  %v69 = vunpack.c.l.b16 %v26
  %v70 = vunpack.c.h.b16 %v26
  %v71 = vpack.c.b16 %v65, %v63
  %v72 = vpack.c.b16 %v66, %v64
  %v73 = vpack.c.b16 %v69, %v67
  %v74 = vpack.c.b16 %v70, %v68
  %v111 = vunpack.c.l.b16 %v27
  %v112 = vunpack.c.l.b16 %v28
  %v113 = vunpack.c.l.b16 %v29
  %v114 = vunpack.c.l.b16 %v30
  %v115 = vunpack.c.l.b16 %v31
  %v116 = vunpack.c.l.b16 %v32
  %v117 = vunpack.c.l.b16 %v33
  %v118 = vunpack.c.l.b16 %v34
  %v119 = vunpack.c.l.b16 %v35
  %v120 = vunpack.c.l.b16 %v36
  %v121 = vunpack.c.l.b16 %v37
  %v122 = vunpack.c.l.b16 %v38
  %v123 = vunpack.c.l.b16 %v39
  %v124 = vunpack.c.l.b16 %v40
  %v125 = vunpack.c.l.b16 %v41
  %v126 = vunpack.c.l.b16 %v42
  %v127 = vunpack.c.l.b16 %v43
  %v128 = vunpack.c.l.b16 %v44
  %v129 = vunpack.c.l.b16 %v45
  %v130 = vunpack.c.l.b16 %v46
  %v131 = vunpack.c.l.b16 %v47
  %v132 = vunpack.c.l.b16 %v48
  %v133 = vunpack.c.l.b16 %v49
  %v134 = vunpack.c.l.b16 %v50
  %v135 = vunpack.c.l.b16 %v51
  %v136 = vunpack.c.l.b16 %v52
  %v137 = vunpack.c.l.b16 %v53
  %v138 = vunpack.c.l.b16 %v54
  %v139 = vunpack.c.l.b16 %v55
  %v140 = vunpack.c.l.b16 %v56
  %v141 = vunpack.c.l.b16 %v57
  %v142 = vunpack.c.l.b16 %v58
  %v143 = vpack.c.b16 %v112, %v111
  %v144 = vpack.c.b16 %v114, %v113
  %v145 = vpack.c.b16 %v116, %v115
  %v146 = vpack.c.b16 %v118, %v117
  %v147 = vpack.c.b16 %v120, %v119
  %v148 = vpack.c.b16 %v122, %v121
  %v149 = vpack.c.b16 %v124, %v123
  %v150 = vpack.c.b16 %v126, %v125
  %v151 = vpack.c.b16 %v128, %v127
  %v152 = vpack.c.b16 %v130, %v129
  %v153 = vpack.c.b16 %v132, %v131
  %v154 = vpack.c.b16 %v134, %v133
  %v155 = vpack.c.b16 %v136, %v135
  %v156 = vpack.c.b16 %v138, %v137
  %v157 = vpack.c.b16 %v140, %v139
  %v158 = vpack.c.b16 %v142, %v141
  %175 = vmatpush.bf16.msra.mxu0 %v150
  %176 = vmatpush.bf16.msra.mxu0 %v149
  %177 = vmatpush.bf16.msra.mxu0 %v148
  %178 = vmatpush.bf16.msra.mxu0 %v147
  %179 = vmatpush.bf16.msra.mxu0 %v146
  %180 = vmatpush.bf16.msra.mxu0 %v145
  %181 = vmatpush.bf16.msra.mxu0 %v144
  %182 = vmatpush.bf16.msra.mxu0 %v143
  %183 = vmatmul.bf16.gmra.mxu0 %v71
  %v184 = vpop.f32.mrf.mxu0
  %v185 = vadd.f32 0.0, %v184
  %v186 = vpop.f32.mrf.mxu0
  %v187 = vadd.f32 0.0, %v186
  %188 = vmatmul.bf16.gmra.mxu0 %v73
  %v189 = vpop.f32.mrf.mxu0
  %v190 = vadd.f32 0.0, %v189
  %v191 = vpop.f32.mrf.mxu0
  %v192 = vadd.f32 0.0, %v191
  %193 = vdwg.mxu0
  %194 = vmatpush.bf16.msra.mxu0 %v158
  %195 = vmatpush.bf16.msra.mxu0 %v157
  %196 = vmatpush.bf16.msra.mxu0 %v156
  %197 = vmatpush.bf16.msra.mxu0 %v155
  %198 = vmatpush.bf16.msra.mxu0 %v154
  %199 = vmatpush.bf16.msra.mxu0 %v153
  %200 = vmatpush.bf16.msra.mxu0 %v152
  %201 = vmatpush.bf16.msra.mxu0 %v151
  %202 = vmatmul.bf16.gmra.mxu0 %v72
  %v203 = vpop.f32.mrf.mxu0
  %v204 = vadd.f32 %v185, %v203
  %v205 = vpop.f32.mrf.mxu0
  %v206 = vadd.f32 %v187, %v205
  %207 = vmatmul.bf16.gmra.mxu0 %v74
  %v208 = vpop.f32.mrf.mxu0
  %v209 = vadd.f32 %v190, %v208
  %v210 = vpop.f32.mrf.mxu0
  %v211 = vadd.f32 %v192, %v210
  %212 = vdwg.mxu0
  %v213 = vadd.f32 %v19, %v204
  %v214 = vadd.f32 %v20, %v206
  %v215 = vadd.f32 %v21, %v209
  %v216 = vadd.f32 %v22, %v211
  %217 = vst [vmem:[%s2] sm:$0xff] %v213
  %218 = vst [vmem:[%s2 + $0x8] sm:$0xff] %v214
  %219 = vst [vmem:[%s2 + $0x10] sm:$0xff] %v215
  %220 = vst [vmem:[%s2 + $0x18] sm:$0xff] %v216
  // Predicated region
  $region14: #{discriminator_forward.6} parent=0 // pred_check
    %p221 = pneg %p11
  $region15: #{discriminator_forward.6} parent=0 // pred_check_branch
    %223 = sbr.rel (%p221) target = $region17
  $region16: #{discriminator_forward.6} parent=0 // pred_region
    %v224 = vld [vmem:[%s2] sm:$0xff]
    %v225 = vld [vmem:[%s2 + $0x8] sm:$0xff]
    %v226 = vld [vmem:[%s2 + $0x10] sm:$0xff]
    %v227 = vld [vmem:[%s2 + $0x18] sm:$0xff]
    %228 = vst [vmem:[%s2] sm:$0xff] %v224
    %229 = vst [vmem:[%s2 + $0x8] sm:$0xff] %v225
    %230 = vst [vmem:[%s2 + $0x10] sm:$0xff] %v226
    %231 = vst [vmem:[%s2 + $0x18] sm:$0xff] %v227
  $region17: #{discriminator_forward.6} parent=0 // pred_fallthru
    _
  // Predicated region
  $region18: #{discriminator_forward.6} parent=0 // pred_check
    _
  $region19: #{discriminator_forward.6} parent=0 // pred_check_branch
    %233 = sbr.rel (0) target = $region21
  $region20: #{discriminator_forward.6} parent=0 // pred_region
    _
  $region21: #{discriminator_forward.6} parent=0 // pred_fallthru
    _
  // Predicated region
  $region22: #{discriminator_forward.6} parent=0 // pred_check
    _
  $region23: #{discriminator_forward.6} parent=0 // pred_check_branch
    %235 = sbr.rel (0) target = $region25
  $region24: #{discriminator_forward.6} parent=0 // pred_region
    _
  $region25: #{discriminator_forward.6} parent=0 // pred_fallthru
    _

</llo_original>
